<compile_context>
chip_gen: v7x
topology: tpu7x:2x2x1
jax: 0.10.0
libtpu: 0.0.40
codegen_flags: <defaults>
</compile_context>

<pallas_src>
import functools

import jax
import jax.numpy as jnp
from jax.experimental import pallas as pl
from jax.experimental.pallas import tpu as pltpu

_LANE = 128
_SUB = 8


# ---------------------------------------------------------------------------
# Kernels
# ---------------------------------------------------------------------------
def _bn_train_fused_kernel(x_ref, w_ref, b_ref, rm_ref, rv_ref,
                           y_ref, new_rm_ref, new_rv_ref,
                           *, eps, mome1, mome2, n):
    """Whole batch resident per feature tile: two-pass batch statistics
    (no catastrophic cancellation), fused affine, running-stat update.
    Everything is per-lane, so garbage in out-of-bounds lanes of a ragged last
    feature tile never contaminates valid lanes (their stores are masked)."""
    x = x_ref[...].astype(jnp.float32)                     # (N, TILE_C)
    mean = jnp.sum(x, axis=0, keepdims=True) * (1.0 / n)   # (1, TILE_C)
    diff = x - mean
    # torch.var(dim=0) is the unbiased estimator (divide by N-1).
    # TODO(synk): torch returns NaN for N == 1; we clamp the divisor instead.
    var = jnp.sum(diff * diff, axis=0, keepdims=True) * (1.0 / max(n - 1, 1))
    inv_std = jax.lax.rsqrt(eps + var)                      # EUP rsqrt

    w = w_ref[...].astype(jnp.float32)
    b = b_ref[...].astype(jnp.float32)
    scale = inv_std * w
    y_ref[...] = (diff * scale + b).astype(y_ref.dtype)

    rm = rm_ref[...].astype(jnp.float32)
    rv = rv_ref[...].astype(jnp.float32)
    new_rm_ref[...] = rm * mome1 + (1.0 - mome1) * mean
    new_rv_ref[...] = rv * mome2 + (1.0 - mome2) * var


def _bn_stats_kernel(x_ref, s1_ref, s2_ref, *, tile_n, n, ragged):
    """Large-batch pass 1: per-feature sum / sum-of-squares accumulated over
    N-chunks.  The (1, TILE_C) accumulators stay resident across the last
    ("arbitrary") grid axis; init at chunk 0 via pl.when."""
    i = pl.program_id(1)

    @pl.when(i == 0)
    def _():
        s1_ref[...] = jnp.zeros_like(s1_ref)
        s2_ref[...] = jnp.zeros_like(s2_ref)

    x = x_ref[...].astype(jnp.float32)                      # (TILE_N, TILE_C)
    if ragged:
        # Mask out-of-range batch rows of the ragged last chunk (their contents
        # are undefined) before the cross-sublane reductions.
        row = i * tile_n + jax.lax.broadcasted_iota(jnp.int32, x.shape, 0)
        x = jnp.where(row < n, x, 0.0)
    s1_ref[...] += jnp.sum(x, axis=0, keepdims=True)
    s2_ref[...] += jnp.sum(x * x, axis=0, keepdims=True)


def _bn_apply_kernel(x_ref, scale_ref, shift_ref, y_ref):
    """y = x * scale + shift with precomputed per-feature scale / shift rows."""
    y_ref[...] = (x_ref[...].astype(jnp.float32) * scale_ref[...]
                  + shift_ref[...]).astype(y_ref.dtype)


# ---------------------------------------------------------------------------
# Tiling policy (generation-aware)
# ---------------------------------------------------------------------------
def _vmem_capacity_bytes():
    try:
        return int(pltpu.get_tpu_info().vmem_capacity_bytes)
    except Exception:
        return 64 << 20          # conservative: v7x physical VMEM per core


def _budgets():
    vmem = _vmem_capacity_bytes()
    # Resident x/y double buffers target ~40% of physical VMEM (headroom for
    # f32 compute temporaries / compiler scratch); scoped limit at ~75%.
    budget = max(8 << 20, min((vmem * 2) // 5, 48 << 20))
    vmem_limit = max(32 << 20, min((vmem * 3) // 4, 96 << 20))
    return budget, int(vmem_limit)


def _round_down(x, m):
    return (x // m) * m


def _fused_tile_c(n, c, itemsize, budget):
    """Feature-tile width (multiple of 128) for the whole-batch-resident path,
    or 0 if even a 128-wide tile of 2x-in + 2x-out buffers busts the budget."""
    cp = pl.cdiv(c, _LANE) * _LANE
    bytes_per_col = 4 * n * itemsize            # 2 input + 2 output buffers
    tile = _round_down(budget // bytes_per_col, _LANE)
    if tile < _LANE:
        return 0
    tile = min(tile, cp)
    # Keep >= 2 feature tiles when C allows it: overlaps DMA with compute and
    # lets the "parallel" axis split across v7x's two TensorCores.
    if cp >= 2 * _LANE:
        tile = min(tile, pl.cdiv(pl.cdiv(cp, 2), _LANE) * _LANE)
    return tile


def _chunked_tiles(n, c, itemsize, budget):
    """Block sizes for the large-batch streaming path (N chunked)."""
    cp = pl.cdiv(c, _LANE) * _LANE
    tile_c = min(cp, 512)
    tile_n = _round_down(budget // (4 * tile_c * itemsize), _SUB)
    tile_n = max(_SUB, min(tile_n, max(_round_down(n, _SUB), _SUB)))
    return tile_n, tile_c


# ---------------------------------------------------------------------------
# Wrappers
# ---------------------------------------------------------------------------
def _apply_affine(x, scale, shift, tile_n, tile_c, vmem_limit):
    """Streaming y = x * scale + shift.  tile_n must equal N when the N axis is
    not chunked (so the block first dim equals the full array dim)."""
    n, c = x.shape
    grid_c = pl.cdiv(c, tile_c)
    grid_n = pl.cdiv(n, tile_n)
    scale2 = scale.reshape(1, c).astype(jnp.float32)
    shift2 = shift.reshape(1, c).astype(jnp.float32)
    # TODO(synk): for tiny blocks with long grids, pipeline_mode=pl.Buffered(3)
    # on x would hide DMA latency; blocks here are sized to multi-MiB already.
    if grid_n == 1:
        grid = (grid_c,)
        x_spec = pl.BlockSpec((tile_n, tile_c), lambda j: (0, j))
        r_spec = pl.BlockSpec((1, tile_c), lambda j: (0, j))
        sem = ("parallel",)
    else:
        grid = (grid_c, grid_n)
        x_spec = pl.BlockSpec((tile_n, tile_c), lambda j, i: (i, j))
        r_spec = pl.BlockSpec((1, tile_c), lambda j, i: (0, j))
        sem = ("parallel", "parallel")
    return pl.pallas_call(
        _bn_apply_kernel,
        grid=grid,
        in_specs=[x_spec, r_spec, r_spec],
        out_specs=x_spec,
        out_shape=jax.ShapeDtypeStruct((n, c), x.dtype),
        compiler_params=pltpu.CompilerParams(
            dimension_semantics=sem, vmem_limit_bytes=vmem_limit),
    )(x, scale2, shift2)


def batchnorm1d_forward(x, weight, bias, running_mean, running_var,
                        *, eps=1e-5, mome1=0.8, mome2=0.9, training=True):
    """Forward of the custom BatchNorm1d.

    x: (N, C). weight/bias/running_mean/running_var: (C,).
    training=True  -> (y, new_running_mean, new_running_var)
    training=False -> y
    """
    n, c = x.shape
    out_dtype = x.dtype
    itemsize = jnp.dtype(out_dtype).itemsize
    budget, vmem_limit = _budgets()
    tile_c = _fused_tile_c(n, c, itemsize, budget)
    eps, mome1, mome2 = float(eps), float(mome1), float(mome2)

    if not training:
        # Eval: the per-feature scale/shift from running stats is (C,)-sized
        # (negligible next to streaming x), so compute it in plain JAX and run
        # one fused mul+add kernel over x.
        scale = jax.lax.rsqrt(eps + running_var.astype(jnp.float32)) \
            * weight.astype(jnp.float32)
        shift = bias.astype(jnp.float32) - running_mean.astype(jnp.float32) * scale
        if tile_c:
            return _apply_affine(x, scale, shift, n, tile_c, vmem_limit)
        tile_n, tile_c = _chunked_tiles(n, c, itemsize, budget)
        return _apply_affine(x, scale, shift, tile_n, tile_c, vmem_limit)

    if tile_c:
        # Common case: whole batch resident per feature tile -> one streaming
        # read of x, one write of y, stats + running-stat update fused.
        w2 = weight.reshape(1, c).astype(jnp.float32)
        b2 = bias.reshape(1, c).astype(jnp.float32)
        rm2 = running_mean.reshape(1, c).astype(jnp.float32)
        rv2 = running_var.reshape(1, c).astype(jnp.float32)
        x_spec = pl.BlockSpec((n, tile_c), lambda j: (0, j))
        r_spec = pl.BlockSpec((1, tile_c), lambda j: (0, j))
        kernel = functools.partial(_bn_train_fused_kernel, eps=eps,
                                   mome1=mome1, mome2=mome2, n=int(n))
        y, new_rm, new_rv = pl.pallas_call(
            kernel,
            grid=(pl.cdiv(c, tile_c),),
            in_specs=[x_spec, r_spec, r_spec, r_spec, r_spec],
            out_specs=(x_spec, r_spec, r_spec),
            out_shape=(
                jax.ShapeDtypeStruct((n, c), out_dtype),
                jax.ShapeDtypeStruct((1, c), jnp.float32),
                jax.ShapeDtypeStruct((1, c), jnp.float32),
            ),
            compiler_params=pltpu.CompilerParams(
                dimension_semantics=("parallel",),
                vmem_limit_bytes=vmem_limit),
        )(x, w2, b2, rm2, rv2)
        new_rm = new_rm.reshape(c).astype(running_mean.dtype)
        new_rv = new_rv.reshape(c).astype(running_var.dtype)
        return y, new_rm, new_rv

    # Large batch: (N, 128) x 4 buffers would bust VMEM, so chunk N.
    # Pass 1 streams x for sum / sum-of-squares, pass 2 streams it again for
    # the affine (2 reads + 1 write of x total, each at HBM roofline).
    tile_n, tile_c = _chunked_tiles(n, c, itemsize, budget)
    grid_c = pl.cdiv(c, tile_c)
    grid_n = pl.cdiv(n, tile_n)
    stats_kernel = functools.partial(_bn_stats_kernel, tile_n=tile_n, n=int(n),
                                     ragged=bool(n % tile_n))
    x_spec = pl.BlockSpec((tile_n, tile_c), lambda j, i: (i, j))
    s_spec = pl.BlockSpec((1, tile_c), lambda j, i: (0, j))
    s1, s2 = pl.pallas_call(
        stats_kernel,
        grid=(grid_c, grid_n),
        in_specs=[x_spec],
        out_specs=(s_spec, s_spec),
        out_shape=(jax.ShapeDtypeStruct((1, c), jnp.float32),
                   jax.ShapeDtypeStruct((1, c), jnp.float32)),
        compiler_params=pltpu.CompilerParams(
            dimension_semantics=("parallel", "arbitrary"),
            vmem_limit_bytes=vmem_limit),
    )(x)
    s1 = s1.reshape(c)
    s2 = s2.reshape(c)
    mean = s1 * (1.0 / n)
    # One-pass variance can cancel catastrophically in f32 -> clamp at 0.
    var = jnp.maximum((s2 - n * mean * mean) * (1.0 / max(n - 1, 1)), 0.0)
    scale = jax.lax.rsqrt(eps + var) * weight.astype(jnp.float32)
    shift = bias.astype(jnp.float32) - mean * scale
    new_rm = (running_mean.astype(jnp.float32) * mome1
              + (1.0 - mome1) * mean).astype(running_mean.dtype)
    new_rv = (running_var.astype(jnp.float32) * mome2
              + (1.0 - mome2) * var).astype(running_var.dtype)
    y = _apply_affine(x, scale, shift, tile_n, tile_c, vmem_limit)
    return y, new_rm, new_rv


if __name__ == "__main__":
    # Module __init__: weight = ones(C), bias = ones(C),
    # running_mean = ones(C), running_var = ones(C).
    N, C = 8, 32
    key = jax.random.PRNGKey(0)
    x = jax.random.normal(key, (N, C), dtype=jnp.float32)

    weight = jnp.ones((C,), jnp.float32)
    bias = jnp.ones((C,), jnp.float32)
    running_mean = jnp.ones((C,), jnp.float32)
    running_var = jnp.ones((C,), jnp.float32)

    # training-mode forward (batch stats + running-stat updates)
    y_train, new_rm, new_rv = batchnorm1d_forward(
        x, weight, bias, running_mean, running_var, training=True)
    jax.block_until_ready((y_train, new_rm, new_rv))

    # eval-mode forward (uses running stats)
    y_eval = batchnorm1d_forward(
        x, weight, bias, running_mean, running_var, training=False)
    jax.block_until_ready(y_eval)

    # correctness check against a pure-JAX reference of the module's forward
    mean_ref = x.mean(axis=0)
    var_ref = x.var(axis=0, ddof=1)          # unbiased, matches torch.var default
    y_ref = (x - mean_ref) / jnp.sqrt(1e-5 + var_ref) * weight + bias
    assert jnp.allclose(y_train, y_ref, atol=1e-4, rtol=1e-4)
    assert jnp.allclose(new_rm, running_mean * 0.8 + 0.2 * mean_ref,
                        atol=1e-5, rtol=1e-5)
    assert jnp.allclose(new_rv, running_var * 0.9 + 0.1 * var_ref,
                        atol=1e-5, rtol=1e-5)
    y_eval_ref = (x - running_mean) / jnp.sqrt(1e-5 + running_var) * weight + bias
    assert jnp.allclose(y_eval, y_eval_ref, atol=1e-4, rtol=1e-4)

    print("KERNEL_OK")
</pallas_src>

<mosaic_0001>
module attributes {stable_mosaic.version = 11 : i64} {
  func.func @_bn_train_fused_kernel(%arg0: i32, %arg1: memref<8x128xf32, #tpu.memory_space<vmem>>, %arg2: memref<1x128xf32, #tpu.memory_space<vmem>>, %arg3: memref<1x128xf32, #tpu.memory_space<vmem>>, %arg4: memref<1x128xf32, #tpu.memory_space<vmem>>, %arg5: memref<1x128xf32, #tpu.memory_space<vmem>>, %arg6: memref<8x128xf32, #tpu.memory_space<vmem>>, %arg7: memref<1x128xf32, #tpu.memory_space<vmem>>, %arg8: memref<1x128xf32, #tpu.memory_space<vmem>>) attributes {dimension_semantics = [#tpu.dimension_semantics<parallel>], iteration_bounds = array<i64: 1>, scalar_prefetch = 0 : i64, scratch_operands = 0 : i64, tpu.core_type = #tpu.core_type<tc>, window_params = [{transform_indices = @transform_0, window_bounds = array<i64: 8, 128>}, {transform_indices = @transform_1, window_bounds = array<i64: 1, 128>}, {transform_indices = @transform_2, window_bounds = array<i64: 1, 128>}, {transform_indices = @transform_3, window_bounds = array<i64: 1, 128>}, {transform_indices = @transform_4, window_bounds = array<i64: 1, 128>}, {transform_indices = @transform_5, window_bounds = array<i64: 8, 128>}, {transform_indices = @transform_6, window_bounds = array<i64: 1, 128>}, {transform_indices = @transform_7, window_bounds = array<i64: 1, 128>}]} {
    %c0 = arith.constant 0 : index
    %c0_0 = arith.constant 0 : index
    %0 = vector.load %arg1[%c0, %c0_0] : memref<8x128xf32, #tpu.memory_space<vmem>>, vector<8x128xf32>
    %cst = arith.constant dense<0.000000e+00> : vector<128xf32>
    %1 = vector.multi_reduction <add>, %0, %cst [0] : vector<8x128xf32> to vector<128xf32>
    %2 = vector.shape_cast %1 : vector<128xf32> to vector<1x128xf32>
    %cst_1 = arith.constant 1.250000e-01 : f32
    %3 = vector.broadcast %cst_1 : f32 to vector<1x128xf32>
    %4 = arith.mulf %2, %3 : vector<1x128xf32>
    %5 = vector.broadcast %4 : vector<1x128xf32> to vector<8x128xf32>
    %6 = arith.subf %0, %5 : vector<8x128xf32>
    %7 = arith.mulf %6, %6 : vector<8x128xf32>
    %cst_2 = arith.constant dense<0.000000e+00> : vector<128xf32>
    %8 = vector.multi_reduction <add>, %7, %cst_2 [0] : vector<8x128xf32> to vector<128xf32>
    %9 = vector.shape_cast %8 : vector<128xf32> to vector<1x128xf32>
    %cst_3 = arith.constant 0.142857149 : f32
    %10 = vector.broadcast %cst_3 : f32 to vector<1x128xf32>
    %11 = arith.mulf %9, %10 : vector<1x128xf32>
    %cst_4 = arith.constant 9.99999974E-6 : f32
    %12 = vector.broadcast %cst_4 : f32 to vector<1x128xf32>
    %13 = arith.addf %12, %11 : vector<1x128xf32>
    %14 = math.rsqrt %13 : vector<1x128xf32>
    %c0_5 = arith.constant 0 : index
    %c0_6 = arith.constant 0 : index
    %15 = vector.load %arg2[%c0_5, %c0_6] : memref<1x128xf32, #tpu.memory_space<vmem>>, vector<1x128xf32>
    %c0_7 = arith.constant 0 : index
    %c0_8 = arith.constant 0 : index
    %16 = vector.load %arg3[%c0_7, %c0_8] : memref<1x128xf32, #tpu.memory_space<vmem>>, vector<1x128xf32>
    %17 = arith.mulf %14, %15 : vector<1x128xf32>
    %18 = vector.broadcast %17 : vector<1x128xf32> to vector<8x128xf32>
    %19 = arith.mulf %6, %18 : vector<8x128xf32>
    %20 = vector.broadcast %16 : vector<1x128xf32> to vector<8x128xf32>
    %21 = arith.addf %19, %20 : vector<8x128xf32>
    %c0_9 = arith.constant 0 : index
    %c0_10 = arith.constant 0 : index
    %22 = vector.load %arg6[%c0_9, %c0_10] : memref<8x128xf32, #tpu.memory_space<vmem>>, vector<8x128xf32>
    tpu.vector_store %arg6[%c0_9, %c0_10], %21 {strides = array<i32>} : memref<8x128xf32, #tpu.memory_space<vmem>>, vector<8x128xf32>,
    %c0_11 = arith.constant 0 : index
    %c0_12 = arith.constant 0 : index
    %23 = vector.load %arg4[%c0_11, %c0_12] : memref<1x128xf32, #tpu.memory_space<vmem>>, vector<1x128xf32>
    %c0_13 = arith.constant 0 : index
    %c0_14 = arith.constant 0 : index
    %24 = vector.load %arg5[%c0_13, %c0_14] : memref<1x128xf32, #tpu.memory_space<vmem>>, vector<1x128xf32>
    %cst_15 = arith.constant 8.000000e-01 : f32
    %25 = vector.broadcast %cst_15 : f32 to vector<1x128xf32>
    %26 = arith.mulf %23, %25 : vector<1x128xf32>
    %cst_16 = arith.constant 2.000000e-01 : f32
    %27 = vector.broadcast %cst_16 : f32 to vector<1x128xf32>
    %28 = arith.mulf %27, %4 : vector<1x128xf32>
    %29 = arith.addf %26, %28 : vector<1x128xf32>
    %c0_17 = arith.constant 0 : index
    %c0_18 = arith.constant 0 : index
    %30 = vector.load %arg7[%c0_17, %c0_18] : memref<1x128xf32, #tpu.memory_space<vmem>>, vector<1x128xf32>
    tpu.vector_store %arg7[%c0_17, %c0_18], %29 {strides = array<i32>} : memref<1x128xf32, #tpu.memory_space<vmem>>, vector<1x128xf32>,
    %cst_19 = arith.constant 0.899999976 : f32
    %31 = vector.broadcast %cst_19 : f32 to vector<1x128xf32>
    %32 = arith.mulf %24, %31 : vector<1x128xf32>
    %cst_20 = arith.constant 1.000000e-01 : f32
    %33 = vector.broadcast %cst_20 : f32 to vector<1x128xf32>
    %34 = arith.mulf %33, %11 : vector<1x128xf32>
    %35 = arith.addf %32, %34 : vector<1x128xf32>
    %c0_21 = arith.constant 0 : index
    %c0_22 = arith.constant 0 : index
    %36 = vector.load %arg8[%c0_21, %c0_22] : memref<1x128xf32, #tpu.memory_space<vmem>>, vector<1x128xf32>
    tpu.vector_store %arg8[%c0_21, %c0_22], %35 {strides = array<i32>} : memref<1x128xf32, #tpu.memory_space<vmem>>, vector<1x128xf32>,
    return
  }
  func.func @transform_0(%arg0: i32) -> (i32, i32) {
    %c0_i32 = arith.constant 0 : i32
    %c0_i32_0 = arith.constant 0 : i32
    return %c0_i32, %arg0 : i32, i32
  }
  func.func @transform_1(%arg0: i32) -> (i32, i32) {
    %c0_i32 = arith.constant 0 : i32
    %c0_i32_0 = arith.constant 0 : i32
    return %c0_i32, %arg0 : i32, i32
  }
  func.func @transform_2(%arg0: i32) -> (i32, i32) {
    %c0_i32 = arith.constant 0 : i32
    %c0_i32_0 = arith.constant 0 : i32
    return %c0_i32, %arg0 : i32, i32
  }
  func.func @transform_3(%arg0: i32) -> (i32, i32) {
    %c0_i32 = arith.constant 0 : i32
    %c0_i32_0 = arith.constant 0 : i32
    return %c0_i32, %arg0 : i32, i32
  }
  func.func @transform_4(%arg0: i32) -> (i32, i32) {
    %c0_i32 = arith.constant 0 : i32
    %c0_i32_0 = arith.constant 0 : i32
    return %c0_i32, %arg0 : i32, i32
  }
  func.func @transform_5(%arg0: i32) -> (i32, i32) {
    %c0_i32 = arith.constant 0 : i32
    %c0_i32_0 = arith.constant 0 : i32
    return %c0_i32, %arg0 : i32, i32
  }
  func.func @transform_6(%arg0: i32) -> (i32, i32) {
    %c0_i32 = arith.constant 0 : i32
    %c0_i32_0 = arith.constant 0 : i32
    return %c0_i32, %arg0 : i32, i32
  }
  func.func @transform_7(%arg0: i32) -> (i32, i32) {
    %c0_i32 = arith.constant 0 : i32
    %c0_i32_0 = arith.constant 0 : i32
    return %c0_i32, %arg0 : i32, i32
  }
}

</mosaic_0001>

<llo_original>
// kernel: tpu_custom_call.1
$region0: #{tpu_custom_call.1}
  #allocation0 [shape = 'u32[]', space=smem, size = 0x4, offset = 0x4, fixed_abs, tag = 'smem constant byte address 0x4 - core index']
  #allocation1 [shape = 'u32[144,128]{1,0:T(1,128)}', space=vmem, size = 0x12000, scoped, tag = 'internal scratch']
  %s0 = inlined_call_operand.hbm [shape: f32[8,32], index: 0, kind: input, shape index: {}]
  %s1 = inlined_call_operand.vmem [shape: f32[1,32], index: 1, kind: input, shape index: {}]
  %s2 = inlined_call_operand.vmem [shape: f32[1,32], index: 2, kind: input, shape index: {}]
  %s3 = inlined_call_operand.vmem [shape: f32[1,32], index: 3, kind: input, shape index: {}]
  %s4 = inlined_call_operand.vmem [shape: f32[1,32], index: 4, kind: input, shape index: {}]
  %s5 = inlined_call_operand.hbm [shape: f32[8,32], index: 5, kind: output, shape index: {0}]
  %s6 = inlined_call_operand.hbm [shape: f32[1,32], index: 6, kind: output, shape index: {1}]
  %s7 = inlined_call_operand.hbm [shape: f32[1,32], index: 7, kind: output, shape index: {2}]
  %8 = xla_tuple %s5, %s6, %s7
  %s9 = sld [smem:[#allocation0]]
  $region50: #{tpu_custom_call.1} parent=0
    _
  %s11 = ssub.s32 1, %s9
  %s12 = scalar_select 0, %s11, %s9
  $region1: #{tpu_custom_call.1} parent=0
    #allocation2 [shape = 'u8[4096]{0}', space=vmem, size = 0x1000, scoped, tag = 'input window, operand 0, single buffered']
    #allocation3 [shape = 's32[1]{0}', space=sflag, size = 0x4, scoped, tag = 'scoped memory for tpu_custom_call.1']
    #allocation4 [shape = 's32[1]{0}', space=sflag, size = 0x4, scoped, tag = 'scoped memory for tpu_custom_call.1']
    #allocation5 [shape = 'u8[4096]{0}', space=vmem, size = 0x1000, scoped, tag = 'output window, operand 0, single buffered']
    #allocation6 [shape = 'u8[512]{0}', space=vmem, size = 0x400, scoped, tag = 'output window, operand 1, single buffered']
    #allocation7 [shape = 's32[1]{0}', space=sflag, size = 0x4, scoped, tag = 'scoped memory for tpu_custom_call.1']
    #allocation8 [shape = 'u8[512]{0}', space=vmem, size = 0x400, scoped, tag = 'output window, operand 2, single buffered']
    %13 = vsyncpa [#allocation3], 0
    %14 = vsyncpa [#allocation4], 0
    %15 = vsyncpa [#allocation7], 0
    // Predicated region
    $region2: #{tpu_custom_call.1} parent=1 // pred_check
      _
    $region3: #{tpu_custom_call.1} parent=1 // pred_check_branch
      %17 = sbr.rel (0) target = $region5
    $region4: #{tpu_custom_call.1} parent=1 // pred_region
      %s19 = ssub.s32 128, 128
      %20 = vsyncadd [#allocation3], %s19
      %s22 = sshll.u32 [#allocation2], 4
      %s23 = int_to_ptr.vmem [resolvable:$true] %s22
      %25 = dma.hbm_to_vmem [thread:$0]  %s0, 128, %s23, [#allocation3]
    $region5: #{tpu_custom_call.1} parent=1 // pred_fallthru
      _
    // Predicated region
    $region6: #{tpu_custom_call.1} parent=1 // pred_check
      _
    $region7: #{tpu_custom_call.1} parent=1 // pred_check_branch
      %27 = sbr.rel (0) target = $region9
    $region8: #{tpu_custom_call.1} parent=1 // pred_region
      _
    $region9: #{tpu_custom_call.1} parent=1 // pred_fallthru
      _
    // Predicated region
    $region10: #{tpu_custom_call.1} parent=1 // pred_check
      _
    $region11: #{tpu_custom_call.1} parent=1 // pred_check_branch
      %29 = sbr.rel (0) target = $region13
    $region12: #{tpu_custom_call.1} parent=1 // pred_region
      _
    $region13: #{tpu_custom_call.1} parent=1 // pred_fallthru
      _
    // Predicated region
    $region14: #{tpu_custom_call.1} parent=1 // pred_check
      _
    $region15: #{tpu_custom_call.1} parent=1 // pred_check_branch
      %31 = sbr.rel (0) target = $region17
    $region16: #{tpu_custom_call.1} parent=1 // pred_region
      _
    $region17: #{tpu_custom_call.1} parent=1 // pred_fallthru
      _
    // Predicated region
    $region18: #{tpu_custom_call.1} parent=1 // pred_check
      _
    $region19: #{tpu_custom_call.1} parent=1 // pred_check_branch
      %33 = sbr.rel (0) target = $region21
    $region20: #{tpu_custom_call.1} parent=1 // pred_region
      _
    $region21: #{tpu_custom_call.1} parent=1 // pred_fallthru
      _
    // Predicated region
    $region22: #{tpu_custom_call.1} parent=1 // pred_check
      _
    $region23: #{tpu_custom_call.1} parent=1 // pred_check_branch
      %35 = sbr.rel (0) target = $region25
    $region24: #{tpu_custom_call.1} parent=1 // pred_region
      %36 = dma.done [#allocation3], 128
    $region25: #{tpu_custom_call.1} parent=1 // pred_fallthru
      _
    %v37 = vld [vmem:[#allocation2] sm:$0xff]
    %v38 = vrot.slane %v37, 4
    %v39 = vadd.f32 %v37, %v38
    %v40 = vrot.slane %v39, 2
    %v41 = vadd.f32 %v39, %v40
    %v42 = vrot.slane %v41, 1
    %v43 = vadd.f32 %v41, %v42
    %v44 = vmul.f32 %v43, 0.125
    %v45 = vsub.f32 %v37, %v44
    %v46 = vmul.f32 %v45, %v45
    %v47 = vrot.slane %v46, 4
    %v48 = vadd.f32 %v46, %v47
    %v49 = vrot.slane %v48, 2
    %v50 = vadd.f32 %v48, %v49
    %v51 = vrot.slane %v50, 1
    %v52 = vadd.f32 %v50, %v51
    %v53 = vmul.f32 %v52, 0.14285715
    %v54 = vadd.f32 %v53, 1e-05
    %v55 = vrsqrt.pop %v54
    %v56 = vld [vmem:[%s1] sm:$0x1]
    %v57 = vld [vmem:[%s2] sm:$0x1]
    %v58 = vmul.f32 %v55, %v56
    %v59 = vlaneseq
    %v60 = vshrl.u32 %v59, 7
    %v61 = vsub.s32 0, %v60
    %v62 = vrot.slane %v58, %v61
    %v63 = vmul.f32 %v45, %v62
    %v65 = vlaneseq
    %v66 = vshrl.u32 %v65, 7
    %v67 = vsub.s32 0, %v66
    %v68 = vrot.slane %v57, %v67
    %v70 = vadd.f32 %v63, %v68
    %71 = vst [vmem:[#allocation5] sm:$0xff] %v70
    %v72 = vld [vmem:[%s3] sm:$0x1]
    %v73 = vld [vmem:[%s4] sm:$0x1]
    %v74 = vmul.f32 %v72, 0.8
    %v75 = vmul.f32 %v44, 0.2
    %v76 = vadd.f32 %v74, %v75
    %77 = vst [vmem:[#allocation6] sm:$0x1] %v76
    %v78 = vmul.f32 %v73, 0.9
    %v79 = vmul.f32 %v53, 0.1
    %v80 = vadd.f32 %v78, %v79
    %81 = vst [vmem:[#allocation8] sm:$0x1] %v80
    // Predicated region
    $region26: #{tpu_custom_call.1} parent=1 // pred_check
      _
    $region27: #{tpu_custom_call.1} parent=1 // pred_check_branch
      %83 = sbr.rel (0) target = $region29
    $region28: #{tpu_custom_call.1} parent=1 // pred_region
      %s85 = ssub.s32 128, 128
      %86 = vsyncadd [#allocation4], %s85
      %s88 = sshll.u32 [#allocation5], 4
      %s89 = int_to_ptr.vmem [resolvable:$true] %s88
      %91 = dma.vmem_to_hbm [thread:$0]  %s89, 128, %s5, [#allocation4]
    $region29: #{tpu_custom_call.1} parent=1 // pred_fallthru
      _
    // Predicated region
    $region30: #{tpu_custom_call.1} parent=1 // pred_check
      _
    $region31: #{tpu_custom_call.1} parent=1 // pred_check_branch
      %93 = sbr.rel (0) target = $region33
    $region32: #{tpu_custom_call.1} parent=1 // pred_region
      %s95 = ssub.s32 16, 16
      %96 = vsyncadd [#allocation7], %s95
      %s98 = sshll.u32 [#allocation6], 4
      %s99 = int_to_ptr.vmem [resolvable:$true] %s98
      %101 = dma.vmem_to_hbm [thread:$0]  %s99, 16, %s6, [#allocation7]
    $region33: #{tpu_custom_call.1} parent=1 // pred_fallthru
      _
    // Predicated region
    $region34: #{tpu_custom_call.1} parent=1 // pred_check
      _
    $region35: #{tpu_custom_call.1} parent=1 // pred_check_branch
      %103 = sbr.rel (0) target = $region37
    $region36: #{tpu_custom_call.1} parent=1 // pred_region
      %s105 = ssub.s32 16, 16
      %106 = vsyncadd [#allocation7], %s105
      %s108 = sshll.u32 [#allocation8], 4
      %s109 = int_to_ptr.vmem [resolvable:$true] %s108
      %111 = dma.vmem_to_hbm [thread:$0]  %s109, 16, %s7, [#allocation7]
    $region37: #{tpu_custom_call.1} parent=1 // pred_fallthru
      _
    // Predicated region
    $region38: #{tpu_custom_call.1} parent=1 // pred_check
      _
    $region39: #{tpu_custom_call.1} parent=1 // pred_check_branch
      %113 = sbr.rel (0) target = $region41
    $region40: #{tpu_custom_call.1} parent=1 // pred_region
      %114 = dma.done [#allocation4], 128
    $region41: #{tpu_custom_call.1} parent=1 // pred_fallthru
      _
    // Predicated region
    $region42: #{tpu_custom_call.1} parent=1 // pred_check
      _
    $region43: #{tpu_custom_call.1} parent=1 // pred_check_branch
      %116 = sbr.rel (0) target = $region45
    $region44: #{tpu_custom_call.1} parent=1 // pred_region
      %117 = dma.done [#allocation7], 16
    $region45: #{tpu_custom_call.1} parent=1 // pred_fallthru
      _
    // Predicated region
    $region46: #{tpu_custom_call.1} parent=1 // pred_check
      _
    $region47: #{tpu_custom_call.1} parent=1 // pred_check_branch
      %119 = sbr.rel (0) target = $region49
    $region48: #{tpu_custom_call.1} parent=1 // pred_region
      %120 = dma.done [#allocation7], 16
    $region49: #{tpu_custom_call.1} parent=1 // pred_fallthru
      _
    %121 = vsyncpa [#allocation3], 1
    %122 = vsyncpa [#allocation4], 1
    %123 = vsyncpa [#allocation7], 1

</llo_original>
